<compile_context>
chip_gen: v7x
topology: tpu7x:2x2x1
jax: 0.10.0
libtpu: 0.0.40
codegen_flags: <defaults>
</compile_context>

<pallas_src>
import functools

import jax
import jax.numpy as jnp
from jax.experimental import pallas as pl
from jax.experimental.pallas import tpu as pltpu

LANE = 128


def _round_up(x: int, m: int) -> int:
    return ((x + m - 1) // m) * m


def _f2_kernel(x_ref, w0t_ref, b0_ref, w1t_ref, b1_ref, w2t_ref, b2_ref, out_ref):
    """Fused 3x (matmul + bias + relu) for one batch tile; all data in VMEM."""
    # x arrives f32 straight from HBM; cast in-kernel (no extra HBM pass).
    x = x_ref[...].astype(w0t_ref.dtype)
    a0 = jnp.maximum(
        jnp.dot(x, w0t_ref[...], preferred_element_type=jnp.float32) + b0_ref[...],
        0.0)
    a1 = jnp.maximum(
        jnp.dot(a0.astype(w1t_ref.dtype), w1t_ref[...],
                preferred_element_type=jnp.float32) + b1_ref[...],
        0.0)
    out = jnp.maximum(
        jnp.dot(a1.astype(w2t_ref.dtype), w2t_ref[...],
                preferred_element_type=jnp.float32) + b2_ref[...],
        0.0)
    # Write only the real class columns (k << 128): avoids a wrapper-side
    # (n,128)->(n,k) slice copy; the masked narrow store is negligible traffic.
    out_ref[...] = out[:, :out_ref.shape[1]].astype(out_ref.dtype)


def prepare_f2_params(w0, b0, w1, b1, w2, b2, compute_dtype=jnp.bfloat16):
    """One-time parameter prep: transpose + pad hidden/class dims to 128 lanes.

    Zero padding is numerically exact: padded activation columns are
    relu(0 + 0) = 0 and padded weight rows only ever multiply those zeros.
    Biases stay f32 (bias-add + relu run in f32 on the VPU). bf16 operands are
    native on the MXU of every TPU generation (accumulation stays f32).
    """
    h0, d = w0.shape
    h1 = w1.shape[0]
    k = w2.shape[0]
    h0p, h1p, kp = _round_up(h0, LANE), _round_up(h1, LANE), _round_up(k, LANE)

    def pad2(a, rows, cols):
        return jnp.pad(a, ((0, rows - a.shape[0]), (0, cols - a.shape[1])))

    return dict(
        w0t=pad2(w0.T, d, h0p).astype(compute_dtype),      # (d,   H0P)
        b0=jnp.pad(b0, (0, h0p - h0)).reshape(1, h0p).astype(jnp.float32),
        w1t=pad2(w1.T, h0p, h1p).astype(compute_dtype),    # (H0P, H1P)
        b1=jnp.pad(b1, (0, h1p - h1)).reshape(1, h1p).astype(jnp.float32),
        w2t=pad2(w2.T, h1p, kp).astype(compute_dtype),     # (H1P, KP)
        b2=jnp.pad(b2, (0, kp - k)).reshape(1, kp).astype(jnp.float32),
    )


def _pick_block_n(n: int, d: int, cdt_itemsize: int) -> int:
    """128-aligned batch tile sized for the tightest scoped-VMEM generation."""
    if n <= 256:
        # Single full-extent block (legal for any n; kernel is row-independent).
        return n
    # VMEM bytes per batch row: double-buffered f32 x tile, in-kernel
    # compute-dtype copy of x, double-buffered out tile (lane-padded to 128),
    # plus ~6 lane-wide f32 intermediates (dot outputs / activations).
    per_row = 2 * d * 4 + d * cdt_itemsize + (2 + 6) * LANE * 4
    budget = 20 << 20          # leaves room for weights + headroom under v7x's limits
    tn = max(LANE, (budget // per_row) // LANE * LANE)
    tn = min(tn, 1024)
    # Guarantee >= 2 grid steps so the "parallel" batch axis feeds both v7x TCs.
    half = _round_up((n + 1) // 2, LANE)
    return min(tn, half)


@functools.partial(jax.jit, static_argnames=("k", "block_n"))
def f2_forward(x, params, *, k: int, block_n=None):
    """x: (n, d) f32, params from prepare_f2_params. Returns (n, k) f32."""
    n, d = x.shape
    w0t, w1t, w2t = params["w0t"], params["w1t"], params["w2t"]
    b0, b1, b2 = params["b0"], params["b1"], params["b2"]
    h0p, h1p, kp = w0t.shape[1], w1t.shape[1], w2t.shape[1]
    cdt_itemsize = jnp.dtype(w0t.dtype).itemsize

    if block_n is None:
        block_n = _pick_block_n(n, d, cdt_itemsize)
    grid = (pl.cdiv(n, block_n),)

    inv = lambda shape: pl.BlockSpec(shape, lambda i: (0, 0))  # grid-invariant

    weight_bytes = sum(int(a.size) * a.dtype.itemsize
                       for a in (w0t, b0, w1t, b1, w2t, b2))
    flops = 2 * n * (d * h0p + h0p * h1p + h1p * kp)
    bytes_accessed = x.size * x.dtype.itemsize + weight_bytes + n * k * 4

    # Explicit scoped-VMEM limit: enough for the fat tile even on v5e's 16 MiB
    # default, capped at 48 MiB so it stays well inside v7x's 64 MiB physical.
    need = (block_n * (2 * d * 4 + d * cdt_itemsize + 8 * LANE * 4)
            + 2 * weight_bytes)
    vmem_limit = int(min(48 << 20, max(32 << 20, need + (8 << 20))))

    return pl.pallas_call(
        _f2_kernel,
        out_shape=jax.ShapeDtypeStruct((n, k), jnp.float32),
        grid=grid,
        in_specs=[
            pl.BlockSpec((block_n, d), lambda i: (i, 0)),   # x: tiled over batch
            inv((d, h0p)), inv((1, h0p)),                   # W0^T, b0 (VMEM-resident)
            inv((h0p, h1p)), inv((1, h1p)),                 # W1^T, b1
            inv((h1p, kp)), inv((1, kp)),                   # W2^T, b2
        ],
        out_specs=pl.BlockSpec((block_n, k), lambda i: (i, 0)),
        compiler_params=pltpu.CompilerParams(
            dimension_semantics=("parallel",),
            vmem_limit_bytes=vmem_limit),
        cost_estimate=pl.CostEstimate(
            flops=flops, transcendentals=0, bytes_accessed=bytes_accessed),
    )(x, w0t, b0, w1t, b1, w2t, b2)


def init_f2_params(key, h0, h1, d, k):
    """Deterministic init matching F2.__init__: Uniform(-1/sqrt(d), 1/sqrt(d))."""
    alpha = 1.0 / jnp.sqrt(jnp.float32(d))
    ks = jax.random.split(key, 6)
    u = lambda kk, shape: jax.random.uniform(
        kk, shape, dtype=jnp.float32, minval=-alpha, maxval=alpha)
    return (u(ks[0], (h0, d)), u(ks[3], (h0,)),
            u(ks[1], (h1, h0)), u(ks[4], (h1,)),
            u(ks[2], (k, h1)), u(ks[5], (k,)))


def f2_reference(x, w0, b0, w1, b1, w2, b2):
    a0 = jnp.maximum(x @ w0.T + b0, 0.0)
    a1 = jnp.maximum(a0 @ w1.T + b1, 0.0)
    return jnp.maximum(a1 @ w2.T + b2, 0.0)


if __name__ == "__main__":
    # MNIST-shaped but small: n=64 samples, d=784 features, h0=64, h1=32, k=10.
    n, d, h0, h1, k = 64, 784, 64, 32, 10

    key = jax.random.PRNGKey(0)
    key_x, key_p = jax.random.split(key)
    x = jax.random.normal(key_x, (n, d), dtype=jnp.float32)
    w0, b0, w1, b1, w2, b2 = init_f2_params(key_p, h0, h1, d, k)
    ref = f2_reference(x, w0, b0, w1, b1, w2, b2)

    # f32-operand path (exactness check).
    params_f32 = prepare_f2_params(w0, b0, w1, b1, w2, b2, jnp.float32)
    out = jax.block_until_ready(f2_forward(x, params_f32, k=k))
    assert out.shape == (n, k)
    assert jnp.allclose(out, ref, atol=1e-3, rtol=1e-3), "f32 mismatch vs reference"

    # bf16-operand default path (MXU fast path on all generations; f32 accumulation).
    params_bf16 = prepare_f2_params(w0, b0, w1, b1, w2, b2)
    out_bf16 = jax.block_until_ready(f2_forward(x, params_bf16, k=k))
    assert out_bf16.shape == (n, k)
    assert jnp.allclose(out_bf16, ref, atol=2e-2, rtol=2e-2), "bf16 mismatch vs reference"

    print("KERNEL_OK")
</pallas_src>

<mosaic_0001>
module attributes {stable_mosaic.version = 11 : i64} {
  func.func @_f2_kernel(%arg0: i32, %arg1: memref<64x784xf32, #tpu.memory_space<vmem>>, %arg2: memref<784x128xf32, #tpu.memory_space<vmem>>, %arg3: memref<1x128xf32, #tpu.memory_space<vmem>>, %arg4: memref<128x128xf32, #tpu.memory_space<vmem>>, %arg5: memref<1x128xf32, #tpu.memory_space<vmem>>, %arg6: memref<128x128xf32, #tpu.memory_space<vmem>>, %arg7: memref<1x128xf32, #tpu.memory_space<vmem>>, %arg8: memref<64x10xf32, #tpu.memory_space<vmem>>) attributes {dimension_semantics = [#tpu.dimension_semantics<parallel>], iteration_bounds = array<i64: 1>, scalar_prefetch = 0 : i64, scratch_operands = 0 : i64, tpu.core_type = #tpu.core_type<tc>, window_params = [{transform_indices = @transform_0, window_bounds = array<i64: 64, 784>}, {pipeline_mode = #tpu.pipeline_mode<synchronous>, transform_indices = @transform_1, window_bounds = array<i64: 784, 128>}, {pipeline_mode = #tpu.pipeline_mode<synchronous>, transform_indices = @transform_2, window_bounds = array<i64: 1, 128>}, {pipeline_mode = #tpu.pipeline_mode<synchronous>, transform_indices = @transform_3, window_bounds = array<i64: 128, 128>}, {pipeline_mode = #tpu.pipeline_mode<synchronous>, transform_indices = @transform_4, window_bounds = array<i64: 1, 128>}, {pipeline_mode = #tpu.pipeline_mode<synchronous>, transform_indices = @transform_5, window_bounds = array<i64: 128, 128>}, {pipeline_mode = #tpu.pipeline_mode<synchronous>, transform_indices = @transform_6, window_bounds = array<i64: 1, 128>}, {transform_indices = @transform_7, window_bounds = array<i64: 64, 10>}]} {
    %c0 = arith.constant 0 : index
    %c0_0 = arith.constant 0 : index
    %0 = vector.load %arg1[%c0, %c0_0] : memref<64x784xf32, #tpu.memory_space<vmem>>, vector<64x784xf32>
    %c0_1 = arith.constant 0 : index
    %c0_2 = arith.constant 0 : index
    %1 = vector.load %arg2[%c0_1, %c0_2] : memref<784x128xf32, #tpu.memory_space<vmem>>, vector<784x128xf32>
    %cst = arith.constant dense<0.000000e+00> : vector<64x128xf32>
    %2 = tpu.matmul %0, %1, %cst {dimension_numbers = #tpu.dot_dimension_numbers<[1], [0], [0], [1], [0, 0, 1, 1], [], []>} : vector<64x784xf32>, vector<784x128xf32>, vector<64x128xf32> -> vector<64x128xf32>
    %c0_3 = arith.constant 0 : index
    %c0_4 = arith.constant 0 : index
    %3 = vector.load %arg3[%c0_3, %c0_4] : memref<1x128xf32, #tpu.memory_space<vmem>>, vector<1x128xf32>
    %4 = vector.broadcast %3 : vector<1x128xf32> to vector<64x128xf32>
    %5 = arith.addf %2, %4 : vector<64x128xf32>
    %cst_5 = arith.constant 0.000000e+00 : f32
    %6 = vector.broadcast %cst_5 : f32 to vector<64x128xf32>
    %7 = arith.maximumf %5, %6 : vector<64x128xf32>
    %c0_6 = arith.constant 0 : index
    %c0_7 = arith.constant 0 : index
    %8 = vector.load %arg4[%c0_6, %c0_7] : memref<128x128xf32, #tpu.memory_space<vmem>>, vector<128x128xf32>
    %cst_8 = arith.constant dense<0.000000e+00> : vector<64x128xf32>
    %9 = tpu.matmul %7, %8, %cst_8 {dimension_numbers = #tpu.dot_dimension_numbers<[1], [0], [0], [1], [0, 0, 1, 1], [], []>} : vector<64x128xf32>, vector<128x128xf32>, vector<64x128xf32> -> vector<64x128xf32>
    %c0_9 = arith.constant 0 : index
    %c0_10 = arith.constant 0 : index
    %10 = vector.load %arg5[%c0_9, %c0_10] : memref<1x128xf32, #tpu.memory_space<vmem>>, vector<1x128xf32>
    %11 = vector.broadcast %10 : vector<1x128xf32> to vector<64x128xf32>
    %12 = arith.addf %9, %11 : vector<64x128xf32>
    %cst_11 = arith.constant 0.000000e+00 : f32
    %13 = vector.broadcast %cst_11 : f32 to vector<64x128xf32>
    %14 = arith.maximumf %12, %13 : vector<64x128xf32>
    %c0_12 = arith.constant 0 : index
    %c0_13 = arith.constant 0 : index
    %15 = vector.load %arg6[%c0_12, %c0_13] : memref<128x128xf32, #tpu.memory_space<vmem>>, vector<128x128xf32>
    %cst_14 = arith.constant dense<0.000000e+00> : vector<64x128xf32>
    %16 = tpu.matmul %14, %15, %cst_14 {dimension_numbers = #tpu.dot_dimension_numbers<[1], [0], [0], [1], [0, 0, 1, 1], [], []>} : vector<64x128xf32>, vector<128x128xf32>, vector<64x128xf32> -> vector<64x128xf32>
    %c0_15 = arith.constant 0 : index
    %c0_16 = arith.constant 0 : index
    %17 = vector.load %arg7[%c0_15, %c0_16] : memref<1x128xf32, #tpu.memory_space<vmem>>, vector<1x128xf32>
    %18 = vector.broadcast %17 : vector<1x128xf32> to vector<64x128xf32>
    %19 = arith.addf %16, %18 : vector<64x128xf32>
    %cst_17 = arith.constant 0.000000e+00 : f32
    %20 = vector.broadcast %cst_17 : f32 to vector<64x128xf32>
    %21 = arith.maximumf %19, %20 : vector<64x128xf32>
    %22 = vector.extract_strided_slice %21 {offsets = [0, 0], sizes = [64, 10], strides = [1, 1]} : vector<64x128xf32> to vector<64x10xf32>
    %c0_18 = arith.constant 0 : index
    %c0_19 = arith.constant 0 : index
    %23 = vector.load %arg8[%c0_18, %c0_19] : memref<64x10xf32, #tpu.memory_space<vmem>>, vector<64x10xf32>
    tpu.vector_store %arg8[%c0_18, %c0_19], %22 {strides = array<i32>} : memref<64x10xf32, #tpu.memory_space<vmem>>, vector<64x10xf32>,
    return
  }
  func.func @transform_0(%arg0: i32) -> (i32, i32) {
    %c0_i32 = arith.constant 0 : i32
    %c0_i32_0 = arith.constant 0 : i32
    return %arg0, %c0_i32 : i32, i32
  }
  func.func @transform_1(%arg0: i32) -> (i32, i32) {
    %c0_i32 = arith.constant 0 : i32
    %c0_i32_0 = arith.constant 0 : i32
    %c0_i32_1 = arith.constant 0 : i32
    return %c0_i32, %c0_i32_0 : i32, i32
  }
  func.func @transform_2(%arg0: i32) -> (i32, i32) {
    %c0_i32 = arith.constant 0 : i32
    %c0_i32_0 = arith.constant 0 : i32
    %c0_i32_1 = arith.constant 0 : i32
    return %c0_i32, %c0_i32_0 : i32, i32
  }
  func.func @transform_3(%arg0: i32) -> (i32, i32) {
    %c0_i32 = arith.constant 0 : i32
    %c0_i32_0 = arith.constant 0 : i32
    %c0_i32_1 = arith.constant 0 : i32
    return %c0_i32, %c0_i32_0 : i32, i32
  }
  func.func @transform_4(%arg0: i32) -> (i32, i32) {
    %c0_i32 = arith.constant 0 : i32
    %c0_i32_0 = arith.constant 0 : i32
    %c0_i32_1 = arith.constant 0 : i32
    return %c0_i32, %c0_i32_0 : i32, i32
  }
  func.func @transform_5(%arg0: i32) -> (i32, i32) {
    %c0_i32 = arith.constant 0 : i32
    %c0_i32_0 = arith.constant 0 : i32
    %c0_i32_1 = arith.constant 0 : i32
    return %c0_i32, %c0_i32_0 : i32, i32
  }
  func.func @transform_6(%arg0: i32) -> (i32, i32) {
    %c0_i32 = arith.constant 0 : i32
    %c0_i32_0 = arith.constant 0 : i32
    %c0_i32_1 = arith.constant 0 : i32
    return %c0_i32, %c0_i32_0 : i32, i32
  }
  func.func @transform_7(%arg0: i32) -> (i32, i32) {
    %c0_i32 = arith.constant 0 : i32
    %c0_i32_0 = arith.constant 0 : i32
    return %arg0, %c0_i32 : i32, i32
  }
}

</mosaic_0001>

<llo_original>
// kernel: f2_forward.1
$region0: #{f2_forward.1}
  #allocation0 [shape = 'u32[]', space=smem, size = 0x4, offset = 0x4, fixed_abs, tag = 'smem constant byte address 0x4 - core index']
  #allocation1 [shape = 'u32[144,128]{1,0:T(1,128)}', space=vmem, size = 0x12000, scoped, tag = 'internal scratch']
  %s0 = inlined_call_operand.hbm [shape: f32[64,784], index: 0, kind: input, shape index: {}]
  %s1 = inlined_call_operand.hbm [shape: f32[784,128], index: 1, kind: input, shape index: {}]
  %s2 = inlined_call_operand.vmem [shape: f32[1,128], index: 2, kind: input, shape index: {}]
  %s3 = inlined_call_operand.hbm [shape: f32[128,128], index: 3, kind: input, shape index: {}]
  %s4 = inlined_call_operand.vmem [shape: f32[1,128], index: 4, kind: input, shape index: {}]
  %s5 = inlined_call_operand.hbm [shape: f32[128,128], index: 5, kind: input, shape index: {}]
  %s6 = inlined_call_operand.vmem [shape: f32[1,128], index: 6, kind: input, shape index: {}]
  %s7 = inlined_call_operand.vmem [shape: f32[64,10], index: 7, kind: output, shape index: {}]
  %s8 = sld [smem:[#allocation0]]
  $region54: #{f2_forward.1} parent=0
    _
  %s10 = ssub.s32 1, %s8
  %s11 = scalar_select 0, %s10, %s8
  $region1: #{f2_forward.1} parent=0
    #allocation2 [shape = 'u8[229376]{0}', space=vmem, size = 0x38000, scoped, tag = 'input window, operand 0, single buffered']
    #allocation3 [shape = 's32[1]{0}', space=sflag, size = 0x4, scoped, tag = 'scoped memory for f2_forward.1']
    #allocation4 [shape = 'u8[401408]{0}', space=vmem, size = 0x62000, scoped, tag = 'input window, operand 1, single buffered']
    #allocation5 [shape = 's32[1]{0}', space=sflag, size = 0x4, scoped, tag = 'scoped memory for f2_forward.1']
    #allocation6 [shape = 'u8[65536]{0}', space=vmem, size = 0x10000, scoped, tag = 'input window, operand 3, single buffered']
    #allocation7 [shape = 'u8[65536]{0}', space=vmem, size = 0x10000, scoped, tag = 'input window, operand 5, single buffered']
    #allocation8 [shape = 's32[1]{0}', space=sflag, size = 0x4, scoped, tag = 'scoped memory for f2_forward.1']
    %12 = vsyncpa [#allocation3], 0
    %13 = vsyncpa [#allocation5], 0
    %14 = vsyncpa [#allocation8], 0
    // Predicated region
    $region2: #{f2_forward.1} parent=1 // pred_check
      _
    $region3: #{f2_forward.1} parent=1 // pred_check_branch
      %16 = sbr.rel (0) target = $region5
    $region4: #{f2_forward.1} parent=1 // pred_region
      %s18 = ssub.s32 7168, 7168
      %19 = vsyncadd [#allocation3], %s18
      %s20 = sshll.u32 [#allocation2], 4
      %s21 = int_to_ptr.vmem [resolvable:$true] %s20
      %26 = dma.hbm_to_vmem [thread:$0]  %s0, 7168, %s21, [#allocation3], 896, 896, 56
    $region5: #{f2_forward.1} parent=1 // pred_fallthru
      _
    // Predicated region
    $region6: #{f2_forward.1} parent=1 // pred_check
      _
    $region7: #{f2_forward.1} parent=1 // pred_check_branch
      %28 = sbr.rel (0) target = $region9
    $region8: #{f2_forward.1} parent=1 // pred_region
      %s30 = ssub.s32 12544, 12544
      %31 = vsyncadd [#allocation5], %s30
      %s32 = sshll.u32 [#allocation4], 4
      %s33 = int_to_ptr.vmem [resolvable:$true] %s32
      %38 = dma.hbm_to_vmem [thread:$0]  %s1, 12544, %s33, [#allocation5], 128, 128, 8
    $region9: #{f2_forward.1} parent=1 // pred_fallthru
      _
    // Predicated region
    $region10: #{f2_forward.1} parent=1 // pred_check
      _
    $region11: #{f2_forward.1} parent=1 // pred_check_branch
      %40 = sbr.rel (0) target = $region13
    $region12: #{f2_forward.1} parent=1 // pred_region
      _
    $region13: #{f2_forward.1} parent=1 // pred_fallthru
      _
    // Predicated region
    $region14: #{f2_forward.1} parent=1 // pred_check
      _
    $region15: #{f2_forward.1} parent=1 // pred_check_branch
      %42 = sbr.rel (0) target = $region17
    $region16: #{f2_forward.1} parent=1 // pred_region
      %s44 = ssub.s32 2048, 2048
      %45 = vsyncadd [#allocation5], %s44
      %s46 = sshll.u32 [#allocation6], 4
      %s47 = int_to_ptr.vmem [resolvable:$true] %s46
      %52 = dma.hbm_to_vmem [thread:$0]  %s3, 2048, %s47, [#allocation5], 128, 128, 8
    $region17: #{f2_forward.1} parent=1 // pred_fallthru
      _
    // Predicated region
    $region18: #{f2_forward.1} parent=1 // pred_check
      _
    $region19: #{f2_forward.1} parent=1 // pred_check_branch
      %54 = sbr.rel (0) target = $region21
    $region20: #{f2_forward.1} parent=1 // pred_region
      _
    $region21: #{f2_forward.1} parent=1 // pred_fallthru
      _
    // Predicated region
    $region22: #{f2_forward.1} parent=1 // pred_check
      _
    $region23: #{f2_forward.1} parent=1 // pred_check_branch
      %56 = sbr.rel (0) target = $region25
    $region24: #{f2_forward.1} parent=1 // pred_region
      %s58 = ssub.s32 2048, 2048
      %59 = vsyncadd [#allocation8], %s58
      %s60 = sshll.u32 [#allocation7], 4
      %s61 = int_to_ptr.vmem [resolvable:$true] %s60
      %66 = dma.hbm_to_vmem [thread:$0]  %s5, 2048, %s61, [#allocation8], 128, 128, 8
    $region25: #{f2_forward.1} parent=1 // pred_fallthru
      _
    // Predicated region
    $region26: #{f2_forward.1} parent=1 // pred_check
      _
    $region27: #{f2_forward.1} parent=1 // pred_check_branch
      %68 = sbr.rel (0) target = $region29
    $region28: #{f2_forward.1} parent=1 // pred_region
      _
    $region29: #{f2_forward.1} parent=1 // pred_fallthru
      _
    // Predicated region
    $region30: #{f2_forward.1} parent=1 // pred_check
      _
    $region31: #{f2_forward.1} parent=1 // pred_check_branch
      %70 = sbr.rel (0) target = $region33
    $region32: #{f2_forward.1} parent=1 // pred_region
      %71 = dma.done [#allocation3], 7168
    $region33: #{f2_forward.1} parent=1 // pred_fallthru
      _
    // Predicated region
    $region34: #{f2_forward.1} parent=1 // pred_check
      _
    $region35: #{f2_forward.1} parent=1 // pred_check_branch
      %73 = sbr.rel (0) target = $region37
    $region36: #{f2_forward.1} parent=1 // pred_region
      %74 = dma.done [#allocation5], 12544
    $region37: #{f2_forward.1} parent=1 // pred_fallthru
      _
    // Predicated region
    $region38: #{f2_forward.1} parent=1 // pred_check
      _
    $region39: #{f2_forward.1} parent=1 // pred_check_branch
      %76 = sbr.rel (0) target = $region41
    $region40: #{f2_forward.1} parent=1 // pred_region
      %77 = dma.done [#allocation5], 2048
    $region41: #{f2_forward.1} parent=1 // pred_fallthru
      _
    // Predicated region
    $region42: #{f2_forward.1} parent=1 // pred_check
      _
    $region43: #{f2_forward.1} parent=1 // pred_check_branch
      %79 = sbr.rel (0) target = $region45
    $region44: #{f2_forward.1} parent=1 // pred_region
      %80 = dma.done [#allocation8], 2048
    $region45: #{f2_forward.1} parent=1 // pred_fallthru
      _
    %v81 = vld [vmem:[#allocation2] sm:$0xff]
    %v82 = vld [vmem:[#allocation2 + $0x8] sm:$0xff]
    %v83 = vld [vmem:[#allocation2 + $0x10] sm:$0xff]
    %v84 = vld [vmem:[#allocation2 + $0x18] sm:$0xff]
    %v85 = vld [vmem:[#allocation2 + $0x20] sm:$0xff]
    %v86 = vld [vmem:[#allocation2 + $0x28] sm:$0xff]
    %v87 = vld [vmem:[#allocation2 + $0x30] sm:$0xff]
    %v88 = vld [vmem:[#allocation2 + $0x38] sm:$0xff]
    %v89 = vld [vmem:[#allocation2 + $0x40] sm:$0xff]
    %v90 = vld [vmem:[#allocation2 + $0x48] sm:$0xff]
    %v91 = vld [vmem:[#allocation2 + $0x50] sm:$0xff]
    %v92 = vld [vmem:[#allocation2 + $0x58] sm:$0xff]
    %v93 = vld [vmem:[#allocation2 + $0x60] sm:$0xff]
    %v94 = vld [vmem:[#allocation2 + $0x68] sm:$0xff]
    %v95 = vld [vmem:[#allocation2 + $0x70] sm:$0xff]
    %v96 = vld [vmem:[#allocation2 + $0x78] sm:$0xff]
    %v97 = vld [vmem:[#allocation2 + $0x80] sm:$0xff]
    %v98 = vld [vmem:[#allocation2 + $0x88] sm:$0xff]
    %v99 = vld [vmem:[#allocation2 + $0x90] sm:$0xff]
    %v100 = vld [vmem:[#allocation2 + $0x98] sm:$0xff]
    %v101 = vld [vmem:[#allocation2 + $0xa0] sm:$0xff]
    %v102 = vld [vmem:[#allocation2 + $0xa8] sm:$0xff]
    %v103 = vld [vmem:[#allocation2 + $0xb0] sm:$0xff]
    %v104 = vld [vmem:[#allocation2 + $0xb8] sm:$0xff]
    %v105 = vld [vmem:[#allocation2 + $0xc0] sm:$0xff]
    %v106 = vld [vmem:[#allocation2 + $0xc8] sm:$0xff]
    %v107 = vld [vmem:[#allocation2 + $0xd0] sm:$0xff]
    %v108 = vld [vmem:[#allocation2 + $0xd8] sm:$0xff]
    %v109 = vld [vmem:[#allocation2 + $0xe0] sm:$0xff]
    %v110 = vld [vmem:[#allocation2 + $0xe8] sm:$0xff]
    %v111 = vld [vmem:[#allocation2 + $0xf0] sm:$0xff]
    %v112 = vld [vmem:[#allocation2 + $0xf8] sm:$0xff]
    %v113 = vld [vmem:[#allocation2 + $0x100] sm:$0xff]
    %v114 = vld [vmem:[#allocation2 + $0x108] sm:$0xff]
    %v115 = vld [vmem:[#allocation2 + $0x110] sm:$0xff]
    %v116 = vld [vmem:[#allocation2 + $0x118] sm:$0xff]
    %v117 = vld [vmem:[#allocation2 + $0x120] sm:$0xff]
    %v118 = vld [vmem:[#allocation2 + $0x128] sm:$0xff]
    %v119 = vld [vmem:[#allocation2 + $0x130] sm:$0xff]
    %v120 = vld [vmem:[#allocation2 + $0x138] sm:$0xff]
    %v121 = vld [vmem:[#allocation2 + $0x140] sm:$0xff]
    %v122 = vld [vmem:[#allocation2 + $0x148] sm:$0xff]
    %v123 = vld [vmem:[#allocation2 + $0x150] sm:$0xff]
    %v124 = vld [vmem:[#allocation2 + $0x158] sm:$0xff]
    %v125 = vld [vmem:[#allocation2 + $0x160] sm:$0xff]
    %v126 = vld [vmem:[#allocation2 + $0x168] sm:$0xff]
    %v127 = vld [vmem:[#allocation2 + $0x170] sm:$0xff]
    %v128 = vld [vmem:[#allocation2 + $0x178] sm:$0xff]
    %v129 = vld [vmem:[#allocation2 + $0x180] sm:$0xff]
    %v130 = vld [vmem:[#allocation2 + $0x188] sm:$0xff]
    %v131 = vld [vmem:[#allocation2 + $0x190] sm:$0xff]
    %v132 = vld [vmem:[#allocation2 + $0x198] sm:$0xff]
    %v133 = vld [vmem:[#allocation2 + $0x1a0] sm:$0xff]
    %v134 = vld [vmem:[#allocation2 + $0x1a8] sm:$0xff]
    %v135 = vld [vmem:[#allocation2 + $0x1b0] sm:$0xff]
    %v136 = vld [vmem:[#allocation2 + $0x1b8] sm:$0xff]
    %v137 = vld [vmem:[#allocation4] sm:$0xff]
    %v138 = vld [vmem:[#allocation4 + $0x8] sm:$0xff]
    %v139 = vld [vmem:[#allocation4 + $0x10] sm:$0xff]
    %v140 = vld [vmem:[#allocation4 + $0x18] sm:$0xff]
    %v141 = vld [vmem:[#allocation4 + $0x20] sm:$0xff]
    %v142 = vld [vmem:[#allocation4 + $0x28] sm:$0xff]
    %v143 = vld [vmem:[#allocation4 + $0x30] sm:$0xff]
    %v144 = vld [vmem:[#allocation4 + $0x38] sm:$0xff]
    %v145 = vld [vmem:[#allocation4 + $0x40] sm:$0xff]
    %v146 = vld [vmem:[#allocation4 + $0x48] sm:$0xff]
    %v147 = vld [vmem:[#allocation4 + $0x50] sm:$0xff]
    %v148 = vld [vmem:[#allocation4 + $0x58] sm:$0xff]
    %v149 = vld [vmem:[#allocation4 + $0x60] sm:$0xff]
    %v150 = vld [vmem:[#allocation4 + $0x68] sm:$0xff]
    %v151 = vld [vmem:[#allocation4 + $0x70] sm:$0xff]
    %v152 = vld [vmem:[#allocation4 + $0x78] sm:$0xff]
    %v153 = vld [vmem:[#allocation4 + $0x80] sm:$0xff]
    %v154 = vld [vmem:[#allocation4 + $0x88] sm:$0xff]
    %v155 = vld [vmem:[#allocation4 + $0x90] sm:$0xff]
    %v156 = vld [vmem:[#allocation4 + $0x98] sm:$0xff]
    %v157 = vld [vmem:[#allocation4 + $0xa0] sm:$0xff]
    %v158 = vld [vmem:[#allocation4 + $0xa8] sm:$0xff]
    %v159 = vld [vmem:[#allocation4 + $0xb0] sm:$0xff]
    %v160 = vld [vmem:[#allocation4 + $0xb8] sm:$0xff]
    %v161 = vld [vmem:[#allocation4 + $0xc0] sm:$0xff]
    %v162 = vld [vmem:[#allocation4 + $0xc8] sm:$0xff]
    %v163 = vld [vmem:[#allocation4 + $0xd0] sm:$0xff]
    %v164 = vld [vmem:[#allocation4 + $0xd8] sm:$0xff]
    %v165 = vld [vmem:[#allocation4 + $0xe0] sm:$0xff]
    %v166 = vld [vmem:[#allocation4 + $0xe8] sm:$0xff]
    %v167 = vld [vmem:[#allocation4 + $0xf0] sm:$0xff]
    %v168 = vld [vmem:[#allocation4 + $0xf8] sm:$0xff]
    %v169 = vld [vmem:[#allocation4 + $0x100] sm:$0xff]
    %v170 = vld [vmem:[#allocation4 + $0x108] sm:$0xff]
    %v171 = vld [vmem:[#allocation4 + $0x110] sm:$0xff]
    %v172 = vld [vmem:[#allocation4 + $0x118] sm:$0xff]
    %v173 = vld [vmem:[#allocation4 + $0x120] sm:$0xff]
    %v174 = vld [vmem:[#allocation4 + $0x128] sm:$0xff]
    %v175 = vld [vmem:[#allocation4 + $0x130] sm:$0xff]
    %v176 = vld [vmem:[#allocation4 + $0x138] sm:$0xff]
    %v177 = vld [vmem:[#allocation4 + $0x140] sm:$0xff]
    %v178 = vld [vmem:[#allocation4 + $0x148] sm:$0xff]
    %v179 = vld [vmem:[#allocation4 + $0x150] sm:$0xff]
    %v180 = vld [vmem:[#allocation4 + $0x158] sm:$0xff]
    %v181 = vld [vmem:[#allocation4 + $0x160] sm:$0xff]
    %v182 = vld [vmem:[#allocation4 + $0x168] sm:$0xff]
    %v183 = vld [vmem:[#allocation4 + $0x170] sm:$0xff]
    %v184 = vld [vmem:[#allocation4 + $0x178] sm:$0xff]
    %v185 = vld [vmem:[#allocation4 + $0x180] sm:$0xff]
    %v186 = vld [vmem:[#allocation4 + $0x188] sm:$0xff]
    %v187 = vld [vmem:[#allocation4 + $0x190] sm:$0xff]
    %v188 = vld [vmem:[#allocation4 + $0x198] sm:$0xff]
    %v189 = vld [vmem:[#allocation4 + $0x1a0] sm:$0xff]
    %v190 = vld [vmem:[#allocation4 + $0x1a8] sm:$0xff]
    %v191 = vld [vmem:[#allocation4 + $0x1b0] sm:$0xff]
    %v192 = vld [vmem:[#allocation4 + $0x1b8] sm:$0xff]
    %v193 = vld [vmem:[#allocation4 + $0x1c0] sm:$0xff]
    %v194 = vld [vmem:[#allocation4 + $0x1c8] sm:$0xff]
    %v195 = vld [vmem:[#allocation4 + $0x1d0] sm:$0xff]
    %v196 = vld [vmem:[#allocation4 + $0x1d8] sm:$0xff]
    %v197 = vld [vmem:[#allocation4 + $0x1e0] sm:$0xff]
    %v198 = vld [vmem:[#allocation4 + $0x1e8] sm:$0xff]
    %v199 = vld [vmem:[#allocation4 + $0x1f0] sm:$0xff]
    %v200 = vld [vmem:[#allocation4 + $0x1f8] sm:$0xff]
    %v201 = vld [vmem:[#allocation4 + $0x200] sm:$0xff]
    %v202 = vld [vmem:[#allocation4 + $0x208] sm:$0xff]
    %v203 = vld [vmem:[#allocation4 + $0x210] sm:$0xff]
    %v204 = vld [vmem:[#allocation4 + $0x218] sm:$0xff]
    %v205 = vld [vmem:[#allocation4 + $0x220] sm:$0xff]
    %v206 = vld [vmem:[#allocation4 + $0x228] sm:$0xff]
    %v207 = vld [vmem:[#allocation4 + $0x230] sm:$0xff]
    %v208 = vld [vmem:[#allocation4 + $0x238] sm:$0xff]
    %v209 = vld [vmem:[#allocation4 + $0x240] sm:$0xff]
    %v210 = vld [vmem:[#allocation4 + $0x248] sm:$0xff]
    %v211 = vld [vmem:[#allocation4 + $0x250] sm:$0xff]
    %v212 = vld [vmem:[#allocation4 + $0x258] sm:$0xff]
    %v213 = vld [vmem:[#allocation4 + $0x260] sm:$0xff]
    %v214 = vld [vmem:[#allocation4 + $0x268] sm:$0xff]
    %v215 = vld [vmem:[#allocation4 + $0x270] sm:$0xff]
    %v216 = vld [vmem:[#allocation4 + $0x278] sm:$0xff]
    %v217 = vld [vmem:[#allocation4 + $0x280] sm:$0xff]
    %v218 = vld [vmem:[#allocation4 + $0x288] sm:$0xff]
    %v219 = vld [vmem:[#allocation4 + $0x290] sm:$0xff]
    %v220 = vld [vmem:[#allocation4 + $0x298] sm:$0xff]
    %v221 = vld [vmem:[#allocation4 + $0x2a0] sm:$0xff]
    %v222 = vld [vmem:[#allocation4 + $0x2a8] sm:$0xff]
    %v223 = vld [vmem:[#allocation4 + $0x2b0] sm:$0xff]
    %v224 = vld [vmem:[#allocation4 + $0x2b8] sm:$0xff]
    %v225 = vld [vmem:[#allocation4 + $0x2c0] sm:$0xff]
    %v226 = vld [vmem:[#allocation4 + $0x2c8] sm:$0xff]
    %v227 = vld [vmem:[#allocation4 + $0x2d0] sm:$0xff]
    %v228 = vld [vmem:[#allocation4 + $0x2d8] sm:$0xff]
    %v229 = vld [vmem:[#allocation4 + $0x2e0] sm:$0xff]
    %v230 = vld [vmem:[#allocation4 + $0x2e8] sm:$0xff]
    %v231 = vld [vmem:[#allocation4 + $0x2f0] sm:$0xff]
    %v232 = vld [vmem:[#allocation4 + $0x2f8] sm:$0xff]
    %v233 = vld [vmem:[#allocation4 + $0x300] sm:$0xff]
    %v234 = vld [vmem:[#allocation4 + $0x308] sm:$0xff]
    %v235 = vld [vmem:[%s2] sm:$0x1]
    %v237 = vlaneseq
    %v238 = vshrl.u32 %v237, 7
    %v239 = vsub.s32 0, %v238
    %v240 = vrot.slane %v235, %v239
    %vm242 = vcmask 130048
    %v244 = vsel %vm242, %v87, 0
    %v247 = vsel %vm242, %v94, 0
    %v250 = vsel %vm242, %v101, 0
    %v253 = vsel %vm242, %v108, 0
    %v256 = vsel %vm242, %v115, 0
    %v259 = vsel %vm242, %v122, 0
    %v262 = vsel %vm242, %v129, 0
    %v265 = vsel %vm242, %v136, 0
    %267 = vmatprep.subr.mxu0 0.0
    %268 = vmatpush1.msra.mxu0 %v137
    %269 = vmatprep.subr.mxu0 0.0
    %270 = vmatpush1.msra.mxu0 %v138
    %271 = vmatprep.subr.mxu0 0.0
    %272 = vmatpush1.msra.mxu0 %v139
    %273 = vmatprep.subr.mxu0 0.0
    %274 = vmatpush1.msra.mxu0 %v140
    %275 = vmatprep.subr.mxu0 0.0
    %276 = vmatpush1.msra.mxu0 %v141
    %277 = vmatprep.subr.mxu0 0.0
    %278 = vmatpush1.msra.mxu0 %v142
    %279 = vmatprep.subr.mxu0 0.0
    %280 = vmatpush1.msra.mxu0 %v143
    %281 = vmatprep.subr.mxu0 0.0
    %282 = vmatpush1.msra.mxu0 %v144
    %283 = vmatprep.subr.mxu0 0.0
    %284 = vmatpush1.msra.mxu0 %v145
    %285 = vmatprep.subr.mxu0 0.0
    %286 = vmatpush1.msra.mxu0 %v146
    %287 = vmatprep.subr.mxu0 0.0
    %288 = vmatpush1.msra.mxu0 %v147
    %289 = vmatprep.subr.mxu0 0.0
    %290 = vmatpush1.msra.mxu0 %v148
    %291 = vmatprep.subr.mxu0 0.0
    %292 = vmatpush1.msra.mxu0 %v149
    %293 = vmatprep.subr.mxu0 0.0
    %294 = vmatpush1.msra.mxu0 %v150
    %295 = vmatprep.subr.mxu0 0.0
    %296 = vmatpush1.msra.mxu0 %v151
    %297 = vmatprep.subr.mxu0 0.0
    %298 = vmatpush1.msra.mxu0 %v152
    %299 = vmatprep.subr.mxu0 0.0
    %300 = vmatpush1.msra.mxu0 %v153
    %301 = vmatprep.subr.mxu0 0.0
    %302 = vmatpush1.msra.mxu0 %v154
    %303 = vmatprep.subr.mxu0 0.0
    %304 = vmatpush1.msra.mxu0 %v155
    %305 = vmatprep.subr.mxu0 0.0
    %306 = vmatpush1.msra.mxu0 %v156
    %307 = vmatprep.subr.mxu0 0.0
    %308 = vmatpush1.msra.mxu0 %v157
    %309 = vmatprep.subr.mxu0 0.0
    %310 = vmatpush1.msra.mxu0 %v158
    %311 = vmatprep.subr.mxu0 0.0
    %312 = vmatpush1.msra.mxu0 %v159
    %313 = vmatprep.subr.mxu0 0.0
    %314 = vmatpush1.msra.mxu0 %v160
    %315 = vmatprep.subr.mxu0 0.0
    %316 = vmatpush1.msra.mxu0 %v161
    %317 = vmatprep.subr.mxu0 0.0
    %318 = vmatpush1.msra.mxu0 %v162
    %319 = vmatprep.subr.mxu0 0.0
    %320 = vmatpush1.msra.mxu0 %v163
    %321 = vmatprep.subr.mxu0 0.0
    %322 = vmatpush1.msra.mxu0 %v164
    %323 = vmatprep.subr.mxu0 0.0
    %324 = vmatpush1.msra.mxu0 %v165
    %325 = vmatprep.subr.mxu0 0.0
    %326 = vmatpush1.msra.mxu0 %v166
    %327 = vmatprep.subr.mxu0 0.0
    %328 = vmatpush1.msra.mxu0 %v167
    %329 = vmatprep.subr.mxu0 0.0
    %330 = vmatpush1.msra.mxu0 %v168
    %331 = vmatprep.mubr.f32.mxu0 %v82
    %332 = vmatmul.mubr.f32.gmra.mrb[0].mxu0 %v81
    %v333 = vpop.f32.mrb[0].mxu0
    %v334 = vadd.f32 %v240, %v333
    %v335 = vpop.f32.mrb[0].mxu0
    %336 = vmatprep.mubr.f32.mxu0 %v89
    %337 = vmatmul.mubr.f32.gmra.mrb[0].mxu0 %v88
    %v338 = vpop.f32.mrb[0].mxu0
    %v339 = vadd.f32 %v240, %v338
    %v340 = vpop.f32.mrb[0].mxu0
    %341 = vmatprep.mubr.f32.mxu0 %v96
    %342 = vmatmul.mubr.f32.gmra.mrb[0].mxu0 %v95
    %v343 = vpop.f32.mrb[0].mxu0
    %v344 = vadd.f32 %v240, %v343
    %v345 = vpop.f32.mrb[0].mxu0
    %346 = vmatprep.mubr.f32.mxu0 %v103
    %347 = vmatmul.mubr.f32.gmra.mrb[0].mxu0 %v102
    %v348 = vpop.f32.mrb[0].mxu0
    %v349 = vadd.f32 %v240, %v348
    %v350 = vpop.f32.mrb[0].mxu0
    %351 = vmatprep.mubr.f32.mxu0 %v110
    %352 = vmatmul.mubr.f32.gmra.mrb[0].mxu0 %v109
    %v353 = vpop.f32.mrb[0].mxu0
    %v354 = vadd.f32 %v240, %v353
    %v355 = vpop.f32.mrb[0].mxu0
    %356 = vmatprep.mubr.f32.mxu0 %v117
    %357 = vmatmul.mubr.f32.gmra.mrb[0].mxu0 %v116
    %v358 = vpop.f32.mrb[0].mxu0
    %v359 = vadd.f32 %v240, %v358
    %v360 = vpop.f32.mrb[0].mxu0
    %361 = vmatprep.mubr.f32.mxu0 %v124
    %362 = vmatmul.mubr.f32.gmra.mrb[0].mxu0 %v123
    %v363 = vpop.f32.mrb[0].mxu0
    %v364 = vadd.f32 %v240, %v363
    %v365 = vpop.f32.mrb[0].mxu0
    %366 = vmatprep.mubr.f32.mxu0 %v131
    %367 = vmatmul.mubr.f32.gmra.mrb[0].mxu0 %v130
    %v368 = vpop.f32.mrb[0].mxu0
    %v369 = vadd.f32 %v240, %v368
    %v370 = vpop.f32.mrb[0].mxu0
    %371 = vdwg.mxu0
    %372 = vmatprep.subr.mxu0 0.0
    %373 = vmatpush1.msra.mxu0 %v169
    %374 = vmatprep.subr.mxu0 0.0
    %375 = vmatpush1.msra.mxu0 %v170
    %376 = vmatprep.subr.mxu0 0.0
    %377 = vmatpush1.msra.mxu0 %v171
    %378 = vmatprep.subr.mxu0 0.0
    %379 = vmatpush1.msra.mxu0 %v172
    %380 = vmatprep.subr.mxu0 0.0
    %381 = vmatpush1.msra.mxu0 %v173
    %382 = vmatprep.subr.mxu0 0.0
    %383 = vmatpush1.msra.mxu0 %v174
    %384 = vmatprep.subr.mxu0 0.0
    %385 = vmatpush1.msra.mxu0 %v175
    %386 = vmatprep.subr.mxu0 0.0
    %387 = vmatpush1.msra.mxu0 %v176
    %388 = vmatprep.subr.mxu0 0.0
    %389 = vmatpush1.msra.mxu0 %v177
    %390 = vmatprep.subr.mxu0 0.0
    %391 = vmatpush1.msra.mxu0 %v178
    %392 = vmatprep.subr.mxu0 0.0
    %393 = vmatpush1.msra.mxu0 %v179
    %394 = vmatprep.subr.mxu0 0.0
    %395 = vmatpush1.msra.mxu0 %v180
    %396 = vmatprep.subr.mxu0 0.0
    %397 = vmatpush1.msra.mxu0 %v181
    %398 = vmatprep.subr.mxu0 0.0
    %399 = vmatpush1.msra.mxu0 %v182
    %400 = vmatprep.subr.mxu0 0.0
    %401 = vmatpush1.msra.mxu0 %v183
    %402 = vmatprep.subr.mxu0 0.0
    %403 = vmatpush1.msra.mxu0 %v184
    %404 = vmatprep.subr.mxu0 0.0
    %405 = vmatpush1.msra.mxu0 %v185
    %406 = vmatprep.subr.mxu0 0.0
    %407 = vmatpush1.msra.mxu0 %v186
    %408 = vmatprep.subr.mxu0 0.0
    %409 = vmatpush1.msra.mxu0 %v187
    %410 = vmatprep.subr.mxu0 0.0
    %411 = vmatpush1.msra.mxu0 %v188
    %412 = vmatprep.subr.mxu0 0.0
    %413 = vmatpush1.msra.mxu0 %v189
    %414 = vmatprep.subr.mxu0 0.0
    %415 = vmatpush1.msra.mxu0 %v190
    %416 = vmatprep.subr.mxu0 0.0
    %417 = vmatpush1.msra.mxu0 %v191
    %418 = vmatprep.subr.mxu0 0.0
    %419 = vmatpush1.msra.mxu0 %v192
    %420 = vmatprep.subr.mxu0 0.0
    %421 = vmatpush1.msra.mxu0 %v193
    %422 = vmatprep.subr.mxu0 0.0
    %423 = vmatpush1.msra.mxu0 %v194
    %424 = vmatprep.subr.mxu0 0.0
    %425 = vmatpush1.msra.mxu0 %v195
    %426 = vmatprep.subr.mxu0 0.0
    %427 = vmatpush1.msra.mxu0 %v196
    %428 = vmatprep.subr.mxu0 0.0
    %429 = vmatpush1.msra.mxu0 %v197
    %430 = vmatprep.subr.mxu0 0.0
    %431 = vmatpush1.msra.mxu0 %v198
    %432 = vmatprep.subr.mxu0 0.0
    %433 = vmatpush1.msra.mxu0 %v199
    %434 = vmatprep.subr.mxu0 0.0
    %435 = vmatpush1.msra.mxu0 %v200
    %436 = vmatprep.mubr.f32.mxu0 %v84
    %437 = vmatmul.mubr.f32.gmra.mrb[0].mxu0 %v83
    %v438 = vpop.f32.mrb[0].mxu0
    %v439 = vadd.f32 %v334, %v438
    %v440 = vpop.f32.mrb[0].mxu0
    %441 = vmatprep.mubr.f32.mxu0 %v91
    %442 = vmatmul.mubr.f32.gmra.mrb[0].mxu0 %v90
    %v443 = vpop.f32.mrb[0].mxu0
    %v444 = vadd.f32 %v339, %v443
    %v445 = vpop.f32.mrb[0].mxu0
    %446 = vmatprep.mubr.f32.mxu0 %v98
    %447 = vmatmul.mubr.f32.gmra.mrb[0].mxu0 %v97
    %v448 = vpop.f32.mrb[0].mxu0
    %v449 = vadd.f32 %v344, %v448
    %v450 = vpop.f32.mrb[0].mxu0
    %451 = vmatprep.mubr.f32.mxu0 %v105
    %452 = vmatmul.mubr.f32.gmra.mrb[0].mxu0 %v104
    %v453 = vpop.f32.mrb[0].mxu0
    %v454 = vadd.f32 %v349, %v453
    %v455 = vpop.f32.mrb[0].mxu0
    %456 = vmatprep.mubr.f32.mxu0 %v112
    %457 = vmatmul.mubr.f32.gmra.mrb[0].mxu0 %v111
    %v458 = vpop.f32.mrb[0].mxu0
    %v459 = vadd.f32 %v354, %v458
    %v460 = vpop.f32.mrb[0].mxu0
    %461 = vmatprep.mubr.f32.mxu0 %v119
    %462 = vmatmul.mubr.f32.gmra.mrb[0].mxu0 %v118
    %v463 = vpop.f32.mrb[0].mxu0
    %v464 = vadd.f32 %v359, %v463
    %v465 = vpop.f32.mrb[0].mxu0
    %466 = vmatprep.mubr.f32.mxu0 %v126
    %467 = vmatmul.mubr.f32.gmra.mrb[0].mxu0 %v125
    %v468 = vpop.f32.mrb[0].mxu0
    %v469 = vadd.f32 %v364, %v468
    %v470 = vpop.f32.mrb[0].mxu0
    %471 = vmatprep.mubr.f32.mxu0 %v133
    %472 = vmatmul.mubr.f32.gmra.mrb[0].mxu0 %v132
    %v473 = vpop.f32.mrb[0].mxu0
    %v474 = vadd.f32 %v369, %v473
    %v475 = vpop.f32.mrb[0].mxu0
    %476 = vdwg.mxu0
    %477 = vmatprep.subr.mxu0 0.0
    %478 = vmatpush1.msra.mxu0 %v201
    %479 = vmatprep.subr.mxu0 0.0
    %480 = vmatpush1.msra.mxu0 %v202
    %481 = vmatprep.subr.mxu0 0.0
    %482 = vmatpush1.msra.mxu0 %v203
    %483 = vmatprep.subr.mxu0 0.0
    %484 = vmatpush1.msra.mxu0 %v204
    %485 = vmatprep.subr.mxu0 0.0
    %486 = vmatpush1.msra.mxu0 %v205
    %487 = vmatprep.subr.mxu0 0.0
    %488 = vmatpush1.msra.mxu0 %v206
    %489 = vmatprep.subr.mxu0 0.0
    %490 = vmatpush1.msra.mxu0 %v207
    %491 = vmatprep.subr.mxu0 0.0
    %492 = vmatpush1.msra.mxu0 %v208
    %493 = vmatprep.subr.mxu0 0.0
    %494 = vmatpush1.msra.mxu0 %v209
    %495 = vmatprep.subr.mxu0 0.0
    %496 = vmatpush1.msra.mxu0 %v210
    %497 = vmatprep.subr.mxu0 0.0
    %498 = vmatpush1.msra.mxu0 %v211
    %499 = vmatprep.subr.mxu0 0.0
    %500 = vmatpush1.msra.mxu0 %v212
    %501 = vmatprep.subr.mxu0 0.0
    %502 = vmatpush1.msra.mxu0 %v213
    %503 = vmatprep.subr.mxu0 0.0
    %504 = vmatpush1.msra.mxu0 %v214
    %505 = vmatprep.subr.mxu0 0.0
    %506 = vmatpush1.msra.mxu0 %v215
    %507 = vmatprep.subr.mxu0 0.0
    %508 = vmatpush1.msra.mxu0 %v216
    %509 = vmatprep.subr.mxu0 0.0
    %510 = vmatpush1.msra.mxu0 %v217
    %511 = vmatprep.subr.mxu0 0.0
    %512 = vmatpush1.msra.mxu0 %v218
    %513 = vmatprep.subr.mxu0 0.0
    %514 = vmatpush1.msra.mxu0 %v219
    %515 = vmatprep.subr.mxu0 0.0
    %516 = vmatpush1.msra.mxu0 %v220
    %517 = vmatprep.subr.mxu0 0.0
    %518 = vmatpush1.msra.mxu0 %v221
    %519 = vmatprep.subr.mxu0 0.0
    %520 = vmatpush1.msra.mxu0 %v222
    %521 = vmatprep.subr.mxu0 0.0
    %522 = vmatpush1.msra.mxu0 %v223
    %523 = vmatprep.subr.mxu0 0.0
    %524 = vmatpush1.msra.mxu0 %v224
    %525 = vmatprep.subr.mxu0 0.0
    %526 = vmatpush1.msra.mxu0 %v225
    %527 = vmatprep.subr.mxu0 0.0
    %528 = vmatpush1.msra.mxu0 %v226
    %529 = vmatprep.subr.mxu0 0.0
    %530 = vmatpush1.msra.mxu0 %v227
    %531 = vmatprep.subr.mxu0 0.0
    %532 = vmatpush1.msra.mxu0 %v228
    %533 = vmatprep.subr.mxu0 0.0
    %534 = vmatpush1.msra.mxu0 %v229
    %535 = vmatprep.subr.mxu0 0.0
    %536 = vmatpush1.msra.mxu0 %v230
    %537 = vmatprep.subr.mxu0 0.0
    %538 = vmatpush1.msra.mxu0 %v231
    %539 = vmatprep.subr.mxu0 0.0
    %540 = vmatpush1.msra.mxu0 %v232
    %541 = vmatprep.mubr.f32.mxu0 %v86
    %542 = vmatmul.mubr.f32.gmra.mrb[0].mxu0 %v85
    %v543 = vpop.f32.mrb[0].mxu0
    %v544 = vadd.f32 %v439, %v543
    %v545 = vpop.f32.mrb[0].mxu0
    %546 = vmatprep.mubr.f32.mxu0 %v93
    %547 = vmatmul.mubr.f32.gmra.mrb[0].mxu0 %v92
    %v548 = vpop.f32.mrb[0].mxu0
    %v549 = vadd.f32 %v444, %v548
    %v550 = vpop.f32.mrb[0].mxu0
    %551 = vmatprep.mubr.f32.mxu0 %v100
    %552 = vmatmul.mubr.f32.gmra.mrb[0].mxu0 %v99
    %v553 = vpop.f32.mrb[0].mxu0
    %v554 = vadd.f32 %v449, %v553
    %v555 = vpop.f32.mrb[0].mxu0
    %556 = vmatprep.mubr.f32.mxu0 %v107
    %557 = vmatmul.mubr.f32.gmra.mrb[0].mxu0 %v106
    %v558 = vpop.f32.mrb[0].mxu0
    %v559 = vadd.f32 %v454, %v558
    %v560 = vpop.f32.mrb[0].mxu0
    %561 = vmatprep.mubr.f32.mxu0 %v114
    %562 = vmatmul.mubr.f32.gmra.mrb[0].mxu0 %v113
    %v563 = vpop.f32.mrb[0].mxu0
    %v564 = vadd.f32 %v459, %v563
    %v565 = vpop.f32.mrb[0].mxu0
    %566 = vmatprep.mubr.f32.mxu0 %v121
    %567 = vmatmul.mubr.f32.gmra.mrb[0].mxu0 %v120
    %v568 = vpop.f32.mrb[0].mxu0
    %v569 = vadd.f32 %v464, %v568
    %v570 = vpop.f32.mrb[0].mxu0
    %571 = vmatprep.mubr.f32.mxu0 %v128
    %572 = vmatmul.mubr.f32.gmra.mrb[0].mxu0 %v127
    %v573 = vpop.f32.mrb[0].mxu0
    %v574 = vadd.f32 %v469, %v573
    %v575 = vpop.f32.mrb[0].mxu0
    %576 = vmatprep.mubr.f32.mxu0 %v135
    %577 = vmatmul.mubr.f32.gmra.mrb[0].mxu0 %v134
    %v578 = vpop.f32.mrb[0].mxu0
    %v579 = vadd.f32 %v474, %v578
    %v580 = vpop.f32.mrb[0].mxu0
    %581 = vdwg.mxu0
    %582 = vmatprep.subr.mxu0 0.0
    %583 = vmatpush1.msra.mxu0 %v233
    %584 = vmatprep.subr.mxu0 0.0
    %585 = vmatpush1.msra.mxu0 %v234
    %586 = vmatprep.subr.mxu0 0.0
    %587 = vmatpush1.msra.mxu0 0.0
    %588 = vmatprep.subr.mxu0 0.0
    %589 = vmatpush1.msra.mxu0 0.0
    %590 = vmatprep.subr.mxu0 0.0
    %591 = vmatpush1.msra.mxu0 0.0
    %592 = vmatprep.subr.mxu0 0.0
    %593 = vmatpush1.msra.mxu0 0.0
    %594 = vmatprep.subr.mxu0 0.0
    %595 = vmatpush1.msra.mxu0 0.0
    %596 = vmatprep.subr.mxu0 0.0
    %597 = vmatpush1.msra.mxu0 0.0
    %598 = vmatprep.subr.mxu0 0.0
    %599 = vmatpush1.msra.mxu0 0.0
    %600 = vmatprep.subr.mxu0 0.0
    %601 = vmatpush1.msra.mxu0 0.0
    %602 = vmatprep.subr.mxu0 0.0
    %603 = vmatpush1.msra.mxu0 0.0
    %604 = vmatprep.subr.mxu0 0.0
    %605 = vmatpush1.msra.mxu0 0.0
    %606 = vmatprep.subr.mxu0 0.0
    %607 = vmatpush1.msra.mxu0 0.0
    %608 = vmatprep.subr.mxu0 0.0
    %609 = vmatpush1.msra.mxu0 0.0
    %610 = vmatprep.subr.mxu0 0.0
    %611 = vmatpush1.msra.mxu0 0.0
    %612 = vmatprep.subr.mxu0 0.0
    %613 = vmatpush1.msra.mxu0 0.0
    %614 = vmatprep.subr.mxu0 0.0
    %615 = vmatpush1.msra.mxu0 0.0
    %616 = vmatprep.subr.mxu0 0.0
    %617 = vmatpush1.msra.mxu0 0.0
    %618 = vmatprep.subr.mxu0 0.0
    %619 = vmatpush1.msra.mxu0 0.0
    %620 = vmatprep.subr.mxu0 0.0
    %621 = vmatpush1.msra.mxu0 0.0
    %622 = vmatprep.subr.mxu0 0.0
    %623 = vmatpush1.msra.mxu0 0.0
    %624 = vmatprep.subr.mxu0 0.0
    %625 = vmatpush1.msra.mxu0 0.0
    %626 = vmatprep.subr.mxu0 0.0
    %627 = vmatpush1.msra.mxu0 0.0
    %628 = vmatprep.subr.mxu0 0.0
    %629 = vmatpush1.msra.mxu0 0.0
    %630 = vmatprep.subr.mxu0 0.0
    %631 = vmatpush1.msra.mxu0 0.0
    %632 = vmatprep.subr.mxu0 0.0
    %633 = vmatpush1.msra.mxu0 0.0
    %634 = vmatprep.subr.mxu0 0.0
    %635 = vmatpush1.msra.mxu0 0.0
    %636 = vmatprep.subr.mxu0 0.0
    %637 = vmatpush1.msra.mxu0 0.0
    %638 = vmatprep.subr.mxu0 0.0
    %639 = vmatpush1.msra.mxu0 0.0
    %640 = vmatprep.subr.mxu0 0.0
    %641 = vmatpush1.msra.mxu0 0.0
    %642 = vmatprep.subr.mxu0 0.0
    %643 = vmatpush1.msra.mxu0 0.0
    %644 = vmatprep.subr.mxu0 0.0
    %645 = vmatpush1.msra.mxu0 0.0
    %646 = vmatprep.mubr.f32.mxu0 0.0
    %647 = vmatmul.mubr.f32.gmra.mrb[0].mxu0 %v244
    %v648 = vpop.f32.mrb[0].mxu0
    %v649 = vadd.f32 %v544, %v648
    %v650 = vpop.f32.mrb[0].mxu0
    %651 = vmatprep.mubr.f32.mxu0 0.0
    %652 = vmatmul.mubr.f32.gmra.mrb[0].mxu0 %v247
    %v653 = vpop.f32.mrb[0].mxu0
    %v654 = vadd.f32 %v549, %v653
    %v655 = vpop.f32.mrb[0].mxu0
    %656 = vmatprep.mubr.f32.mxu0 0.0
    %657 = vmatmul.mubr.f32.gmra.mrb[0].mxu0 %v250
    %v658 = vpop.f32.mrb[0].mxu0
    %v659 = vadd.f32 %v554, %v658
    %v660 = vpop.f32.mrb[0].mxu0
    %661 = vmatprep.mubr.f32.mxu0 0.0
    %662 = vmatmul.mubr.f32.gmra.mrb[0].mxu0 %v253
    %v663 = vpop.f32.mrb[0].mxu0
    %v664 = vadd.f32 %v559, %v663
    %v665 = vpop.f32.mrb[0].mxu0
    %666 = vmatprep.mubr.f32.mxu0 0.0
    %667 = vmatmul.mubr.f32.gmra.mrb[0].mxu0 %v256
    %v668 = vpop.f32.mrb[0].mxu0
    %v669 = vadd.f32 %v564, %v668
    %v670 = vpop.f32.mrb[0].mxu0
    %671 = vmatprep.mubr.f32.mxu0 0.0
    %672 = vmatmul.mubr.f32.gmra.mrb[0].mxu0 %v259
    %v673 = vpop.f32.mrb[0].mxu0
    %v674 = vadd.f32 %v569, %v673
    %v675 = vpop.f32.mrb[0].mxu0
    %676 = vmatprep.mubr.f32.mxu0 0.0
    %677 = vmatmul.mubr.f32.gmra.mrb[0].mxu0 %v262
    %v678 = vpop.f32.mrb[0].mxu0
    %v679 = vadd.f32 %v574, %v678
    %v680 = vpop.f32.mrb[0].mxu0
    %681 = vmatprep.mubr.f32.mxu0 0.0
    %682 = vmatmul.mubr.f32.gmra.mrb[0].mxu0 %v265
    %v683 = vpop.f32.mrb[0].mxu0
    %v684 = vadd.f32 %v579, %v683
    %v685 = vpop.f32.mrb[0].mxu0
    %686 = vdwg.mxu0
    %v687 = vmax.f32 %v649, 0.0
    %v688 = vmax.f32 %v654, 0.0
    %v689 = vmax.f32 %v659, 0.0
    %v690 = vmax.f32 %v664, 0.0
    %v691 = vmax.f32 %v669, 0.0
    %v692 = vmax.f32 %v674, 0.0
    %v693 = vmax.f32 %v679, 0.0
    %v694 = vmax.f32 %v684, 0.0
    %v695 = vld [vmem:[#allocation6] sm:$0xff]
    %v696 = vld [vmem:[#allocation6 + $0x8] sm:$0xff]
    %v697 = vld [vmem:[#allocation6 + $0x10] sm:$0xff]
    %v698 = vld [vmem:[#allocation6 + $0x18] sm:$0xff]
    %v699 = vld [vmem:[#allocation6 + $0x20] sm:$0xff]
    %v700 = vld [vmem:[#allocation6 + $0x28] sm:$0xff]
    %v701 = vld [vmem:[#allocation6 + $0x30] sm:$0xff]
    %v702 = vld [vmem:[#allocation6 + $0x38] sm:$0xff]
    %v703 = vld [vmem:[#allocation6 + $0x40] sm:$0xff]
    %v704 = vld [vmem:[#allocation6 + $0x48] sm:$0xff]
    %v705 = vld [vmem:[#allocation6 + $0x50] sm:$0xff]
    %v706 = vld [vmem:[#allocation6 + $0x58] sm:$0xff]
    %v707 = vld [vmem:[#allocation6 + $0x60] sm:$0xff]
    %v708 = vld [vmem:[#allocation6 + $0x68] sm:$0xff]
    %v709 = vld [vmem:[#allocation6 + $0x70] sm:$0xff]
    %v710 = vld [vmem:[#allocation6 + $0x78] sm:$0xff]
    %v711 = vld [vmem:[%s4] sm:$0x1]
    %v713 = vlaneseq
    %v714 = vshrl.u32 %v713, 7
    %v715 = vsub.s32 0, %v714
    %v716 = vrot.slane %v711, %v715
    %718 = vmatprep.subr.mxu0 0.0
    %719 = vmatpush1.msra.mxu0 %v695
    %720 = vmatprep.subr.mxu0 0.0
    %721 = vmatpush1.msra.mxu0 %v696
    %722 = vmatprep.subr.mxu0 0.0
    %723 = vmatpush1.msra.mxu0 %v697
    %724 = vmatprep.subr.mxu0 0.0
    %725 = vmatpush1.msra.mxu0 %v698
    %726 = vmatprep.subr.mxu0 0.0
    %727 = vmatpush1.msra.mxu0 %v699
    %728 = vmatprep.subr.mxu0 0.0
    %729 = vmatpush1.msra.mxu0 %v700
    %730 = vmatprep.subr.mxu0 0.0
    %731 = vmatpush1.msra.mxu0 %v701
    %732 = vmatprep.subr.mxu0 0.0
    %733 = vmatpush1.msra.mxu0 %v702
    %734 = vmatprep.subr.mxu0 0.0
    %735 = vmatpush1.msra.mxu0 %v703
    %736 = vmatprep.subr.mxu0 0.0
    %737 = vmatpush1.msra.mxu0 %v704
    %738 = vmatprep.subr.mxu0 0.0
    %739 = vmatpush1.msra.mxu0 %v705
    %740 = vmatprep.subr.mxu0 0.0
    %741 = vmatpush1.msra.mxu0 %v706
    %742 = vmatprep.subr.mxu0 0.0
    %743 = vmatpush1.msra.mxu0 %v707
    %744 = vmatprep.subr.mxu0 0.0
    %745 = vmatpush1.msra.mxu0 %v708
    %746 = vmatprep.subr.mxu0 0.0
    %747 = vmatpush1.msra.mxu0 %v709
    %748 = vmatprep.subr.mxu0 0.0
    %749 = vmatpush1.msra.mxu0 %v710
    %750 = vmatprep.subr.mxu0 0.0
    %751 = vmatpush1.msra.mxu0 0.0
    %752 = vmatprep.subr.mxu0 0.0
    %753 = vmatpush1.msra.mxu0 0.0
    %754 = vmatprep.subr.mxu0 0.0
    %755 = vmatpush1.msra.mxu0 0.0
    %756 = vmatprep.subr.mxu0 0.0
    %757 = vmatpush1.msra.mxu0 0.0
    %758 = vmatprep.subr.mxu0 0.0
    %759 = vmatpush1.msra.mxu0 0.0
    %760 = vmatprep.subr.mxu0 0.0
    %761 = vmatpush1.msra.mxu0 0.0
    %762 = vmatprep.subr.mxu0 0.0
    %763 = vmatpush1.msra.mxu0 0.0
    %764 = vmatprep.subr.mxu0 0.0
    %765 = vmatpush1.msra.mxu0 0.0
    %766 = vmatprep.subr.mxu0 0.0
    %767 = vmatpush1.msra.mxu0 0.0
    %768 = vmatprep.subr.mxu0 0.0
    %769 = vmatpush1.msra.mxu0 0.0
    %770 = vmatprep.subr.mxu0 0.0
    %771 = vmatpush1.msra.mxu0 0.0
    %772 = vmatprep.subr.mxu0 0.0
    %773 = vmatpush1.msra.mxu0 0.0
    %774 = vmatprep.subr.mxu0 0.0
    %775 = vmatpush1.msra.mxu0 0.0
    %776 = vmatprep.subr.mxu0 0.0
    %777 = vmatpush1.msra.mxu0 0.0
    %778 = vmatprep.subr.mxu0 0.0
    %779 = vmatpush1.msra.mxu0 0.0
    %780 = vmatprep.subr.mxu0 0.0
    %781 = vmatpush1.msra.mxu0 0.0
    %782 = vmatprep.mubr.f32.mxu0 0.0
    %783 = vmatmul.mubr.f32.gmra.mrb[0].mxu0 %v687
    %v784 = vpop.f32.mrb[0].mxu0
    %v785 = vadd.f32 %v716, %v784
    %v786 = vpop.f32.mrb[0].mxu0
    %787 = vmatprep.mubr.f32.mxu0 0.0
    %788 = vmatmul.mubr.f32.gmra.mrb[0].mxu0 %v688
    %v789 = vpop.f32.mrb[0].mxu0
    %v790 = vadd.f32 %v716, %v789
    %v791 = vpop.f32.mrb[0].mxu0
    %792 = vmatprep.mubr.f32.mxu0 0.0
    %793 = vmatmul.mubr.f32.gmra.mrb[0].mxu0 %v689
    %v794 = vpop.f32.mrb[0].mxu0
    %v795 = vadd.f32 %v716, %v794
    %v796 = vpop.f32.mrb[0].mxu0
    %797 = vmatprep.mubr.f32.mxu0 0.0
    %798 = vmatmul.mubr.f32.gmra.mrb[0].mxu0 %v690
    %v799 = vpop.f32.mrb[0].mxu0
    %v800 = vadd.f32 %v716, %v799
    %v801 = vpop.f32.mrb[0].mxu0
    %802 = vmatprep.mubr.f32.mxu0 0.0
    %803 = vmatmul.mubr.f32.gmra.mrb[0].mxu0 %v691
    %v804 = vpop.f32.mrb[0].mxu0
    %v805 = vadd.f32 %v716, %v804
    %v806 = vpop.f32.mrb[0].mxu0
    %807 = vmatprep.mubr.f32.mxu0 0.0
    %808 = vmatmul.mubr.f32.gmra.mrb[0].mxu0 %v692
    %v809 = vpop.f32.mrb[0].mxu0
    %v810 = vadd.f32 %v716, %v809
    %v811 = vpop.f32.mrb[0].mxu0
    %812 = vmatprep.mubr.f32.mxu0 0.0
    %813 = vmatmul.mubr.f32.gmra.mrb[0].mxu0 %v693
    %v814 = vpop.f32.mrb[0].mxu0
    %v815 = vadd.f32 %v716, %v814
    %v816 = vpop.f32.mrb[0].mxu0
    %817 = vmatprep.mubr.f32.mxu0 0.0
    %818 = vmatmul.mubr.f32.gmra.mrb[0].mxu0 %v694
    %v819 = vpop.f32.mrb[0].mxu0
    %v820 = vadd.f32 %v716, %v819
    %v821 = vpop.f32.mrb[0].mxu0
    %822 = vdwg.mxu0
    %v823 = vmax.f32 %v785, 0.0
    %v824 = vmax.f32 %v790, 0.0
    %v825 = vmax.f32 %v795, 0.0
    %v826 = vmax.f32 %v800, 0.0
    %v827 = vmax.f32 %v805, 0.0
    %v828 = vmax.f32 %v810, 0.0
    %v829 = vmax.f32 %v815, 0.0
    %v830 = vmax.f32 %v820, 0.0
    %v831 = vld [vmem:[#allocation7] sm:$0xff]
    %v832 = vld [vmem:[#allocation7 + $0x8] sm:$0xff]
    %v833 = vld [vmem:[#allocation7 + $0x10] sm:$0xff]
    %v834 = vld [vmem:[#allocation7 + $0x18] sm:$0xff]
    %v835 = vld [vmem:[#allocation7 + $0x20] sm:$0xff]
    %v836 = vld [vmem:[#allocation7 + $0x28] sm:$0xff]
    %v837 = vld [vmem:[#allocation7 + $0x30] sm:$0xff]
    %v838 = vld [vmem:[#allocation7 + $0x38] sm:$0xff]
    %v839 = vld [vmem:[#allocation7 + $0x40] sm:$0xff]
    %v840 = vld [vmem:[#allocation7 + $0x48] sm:$0xff]
    %v841 = vld [vmem:[#allocation7 + $0x50] sm:$0xff]
    %v842 = vld [vmem:[#allocation7 + $0x58] sm:$0xff]
    %v843 = vld [vmem:[#allocation7 + $0x60] sm:$0xff]
    %v844 = vld [vmem:[#allocation7 + $0x68] sm:$0xff]
    %v845 = vld [vmem:[#allocation7 + $0x70] sm:$0xff]
    %v846 = vld [vmem:[#allocation7 + $0x78] sm:$0xff]
    %v847 = vld [vmem:[%s6] sm:$0x1]
    %v849 = vlaneseq
    %v850 = vshrl.u32 %v849, 7
    %v851 = vsub.s32 0, %v850
    %v852 = vrot.slane %v847, %v851
    %854 = vmatprep.subr.mxu0 0.0
    %855 = vmatpush1.msra.mxu0 %v831
    %856 = vmatprep.subr.mxu0 0.0
    %857 = vmatpush1.msra.mxu0 %v832
    %858 = vmatprep.subr.mxu0 0.0
    %859 = vmatpush1.msra.mxu0 %v833
    %860 = vmatprep.subr.mxu0 0.0
    %861 = vmatpush1.msra.mxu0 %v834
    %862 = vmatprep.subr.mxu0 0.0
    %863 = vmatpush1.msra.mxu0 %v835
    %864 = vmatprep.subr.mxu0 0.0
    %865 = vmatpush1.msra.mxu0 %v836
    %866 = vmatprep.subr.mxu0 0.0
    %867 = vmatpush1.msra.mxu0 %v837
    %868 = vmatprep.subr.mxu0 0.0
    %869 = vmatpush1.msra.mxu0 %v838
    %870 = vmatprep.subr.mxu0 0.0
    %871 = vmatpush1.msra.mxu0 %v839
    %872 = vmatprep.subr.mxu0 0.0
    %873 = vmatpush1.msra.mxu0 %v840
    %874 = vmatprep.subr.mxu0 0.0
    %875 = vmatpush1.msra.mxu0 %v841
    %876 = vmatprep.subr.mxu0 0.0
    %877 = vmatpush1.msra.mxu0 %v842
    %878 = vmatprep.subr.mxu0 0.0
    %879 = vmatpush1.msra.mxu0 %v843
    %880 = vmatprep.subr.mxu0 0.0
    %881 = vmatpush1.msra.mxu0 %v844
    %882 = vmatprep.subr.mxu0 0.0
    %883 = vmatpush1.msra.mxu0 %v845
    %884 = vmatprep.subr.mxu0 0.0
    %885 = vmatpush1.msra.mxu0 %v846
    %886 = vmatprep.subr.mxu0 0.0
    %887 = vmatpush1.msra.mxu0 0.0
    %888 = vmatprep.subr.mxu0 0.0
    %889 = vmatpush1.msra.mxu0 0.0
    %890 = vmatprep.subr.mxu0 0.0
    %891 = vmatpush1.msra.mxu0 0.0
    %892 = vmatprep.subr.mxu0 0.0
    %893 = vmatpush1.msra.mxu0 0.0
    %894 = vmatprep.subr.mxu0 0.0
    %895 = vmatpush1.msra.mxu0 0.0
    %896 = vmatprep.subr.mxu0 0.0
    %897 = vmatpush1.msra.mxu0 0.0
    %898 = vmatprep.subr.mxu0 0.0
    %899 = vmatpush1.msra.mxu0 0.0
    %900 = vmatprep.subr.mxu0 0.0
    %901 = vmatpush1.msra.mxu0 0.0
    %902 = vmatprep.subr.mxu0 0.0
    %903 = vmatpush1.msra.mxu0 0.0
    %904 = vmatprep.subr.mxu0 0.0
    %905 = vmatpush1.msra.mxu0 0.0
    %906 = vmatprep.subr.mxu0 0.0
    %907 = vmatpush1.msra.mxu0 0.0
    %908 = vmatprep.subr.mxu0 0.0
    %909 = vmatpush1.msra.mxu0 0.0
    %910 = vmatprep.subr.mxu0 0.0
    %911 = vmatpush1.msra.mxu0 0.0
    %912 = vmatprep.subr.mxu0 0.0
    %913 = vmatpush1.msra.mxu0 0.0
    %914 = vmatprep.subr.mxu0 0.0
    %915 = vmatpush1.msra.mxu0 0.0
    %916 = vmatprep.subr.mxu0 0.0
    %917 = vmatpush1.msra.mxu0 0.0
    %918 = vmatprep.mubr.f32.mxu0 0.0
    %919 = vmatmul.mubr.f32.gmra.mrb[0].mxu0 %v823
    %v920 = vpop.f32.mrb[0].mxu0
    %v921 = vadd.f32 %v852, %v920
    %v922 = vpop.f32.mrb[0].mxu0
    %923 = vmatprep.mubr.f32.mxu0 0.0
    %924 = vmatmul.mubr.f32.gmra.mrb[0].mxu0 %v824
    %v925 = vpop.f32.mrb[0].mxu0
    %v926 = vadd.f32 %v852, %v925
    %v927 = vpop.f32.mrb[0].mxu0
    %928 = vmatprep.mubr.f32.mxu0 0.0
    %929 = vmatmul.mubr.f32.gmra.mrb[0].mxu0 %v825
    %v930 = vpop.f32.mrb[0].mxu0
    %v931 = vadd.f32 %v852, %v930
    %v932 = vpop.f32.mrb[0].mxu0
    %933 = vmatprep.mubr.f32.mxu0 0.0
    %934 = vmatmul.mubr.f32.gmra.mrb[0].mxu0 %v826
    %v935 = vpop.f32.mrb[0].mxu0
    %v936 = vadd.f32 %v852, %v935
    %v937 = vpop.f32.mrb[0].mxu0
    %938 = vmatprep.mubr.f32.mxu0 0.0
    %939 = vmatmul.mubr.f32.gmra.mrb[0].mxu0 %v827
    %v940 = vpop.f32.mrb[0].mxu0
    %v941 = vadd.f32 %v852, %v940
    %v942 = vpop.f32.mrb[0].mxu0
    %943 = vmatprep.mubr.f32.mxu0 0.0
    %944 = vmatmul.mubr.f32.gmra.mrb[0].mxu0 %v828
    %v945 = vpop.f32.mrb[0].mxu0
    %v946 = vadd.f32 %v852, %v945
    %v947 = vpop.f32.mrb[0].mxu0
    %948 = vmatprep.mubr.f32.mxu0 0.0
    %949 = vmatmul.mubr.f32.gmra.mrb[0].mxu0 %v829
    %v950 = vpop.f32.mrb[0].mxu0
    %v951 = vadd.f32 %v852, %v950
    %v952 = vpop.f32.mrb[0].mxu0
    %953 = vmatprep.mubr.f32.mxu0 0.0
    %954 = vmatmul.mubr.f32.gmra.mrb[0].mxu0 %v830
    %v955 = vpop.f32.mrb[0].mxu0
    %v956 = vadd.f32 %v852, %v955
    %v957 = vpop.f32.mrb[0].mxu0
    %958 = vdwg.mxu0
    %v959 = vmax.f32 %v921, 0.0
    %v960 = vmax.f32 %v926, 0.0
    %v961 = vmax.f32 %v931, 0.0
    %v962 = vmax.f32 %v936, 0.0
    %v963 = vmax.f32 %v941, 0.0
    %v964 = vmax.f32 %v946, 0.0
    %v965 = vmax.f32 %v951, 0.0
    %v966 = vmax.f32 %v956, 0.0
    %vm967 = vcmask 80896
    %968 = vst.msk [vmem:[%s7] sm:$0xff] %vm967, %v959
    %969 = vst.msk [vmem:[%s7 + $0x8] sm:$0xff] %vm967, %v960
    %970 = vst.msk [vmem:[%s7 + $0x10] sm:$0xff] %vm967, %v961
    %971 = vst.msk [vmem:[%s7 + $0x18] sm:$0xff] %vm967, %v962
    %972 = vst.msk [vmem:[%s7 + $0x20] sm:$0xff] %vm967, %v963
    %973 = vst.msk [vmem:[%s7 + $0x28] sm:$0xff] %vm967, %v964
    %974 = vst.msk [vmem:[%s7 + $0x30] sm:$0xff] %vm967, %v965
    %975 = vst.msk [vmem:[%s7 + $0x38] sm:$0xff] %vm967, %v966
    // Predicated region
    $region46: #{f2_forward.1} parent=1 // pred_check
      _
    $region47: #{f2_forward.1} parent=1 // pred_check_branch
      %977 = sbr.rel (0) target = $region49
    $region48: #{f2_forward.1} parent=1 // pred_region
      _
    $region49: #{f2_forward.1} parent=1 // pred_fallthru
      _
    // Predicated region
    $region50: #{f2_forward.1} parent=1 // pred_check
      _
    $region51: #{f2_forward.1} parent=1 // pred_check_branch
      %979 = sbr.rel (0) target = $region53
    $region52: #{f2_forward.1} parent=1 // pred_region
      _
    $region53: #{f2_forward.1} parent=1 // pred_fallthru
      _
    %980 = vsyncpa [#allocation3], 1
    %981 = vsyncpa [#allocation5], 1
    %982 = vsyncpa [#allocation8], 1

</llo_original>
